<compile_context>
chip_gen: v7x
topology: tpu7x:2x2x1
jax: 0.10.0
libtpu: 0.0.40
codegen_flags: <defaults>
</compile_context>

<pallas_src>
import jax
import jax.numpy as jnp
from jax import lax
from jax.experimental import pallas as pl
from jax.experimental.pallas import tpu as pltpu

_LANES = 128
_MAX_BLOCK_ROWS = 4096   # 4096 x 128 f32 = 2 MiB per block per stream
_MIN_BLOCK_ROWS = 2048   # never shrink below 1 MiB blocks when splitting


def _complex_relu_kernel(re_ref, im_ref, ore_ref, oim_ref):
    # Purely elementwise ReLU on each plane; no XLU/EUP/MXU work.
    ore_ref[...] = jnp.maximum(re_ref[...], 0.0)
    oim_ref[...] = jnp.maximum(im_ref[...], 0.0)


def _choose_block_rows(rows):
    """Largest block that fits the cap; only split when the cap forces it."""
    if rows <= _MAX_BLOCK_ROWS:
        # Single full-extent block (allowed even if rows isn't a multiple of 8).
        return rows
    # Input exceeds the cap: split.  Prefer >= 4 grid steps (helps v7x's two
    # TensorCores keep a pipelined >= 2 steps each) but keep blocks >= 1 MiB so
    # each step still amortizes the ~0.35 us fixed per-step cost on v5e/v6e.
    br = _MAX_BLOCK_ROWS
    while br > _MIN_BLOCK_ROWS and pl.cdiv(rows, br) < 4:
        br //= 2
    return br


def complex_relu(x):
    """Apply ComplexRELU to a complex array of any shape via a Pallas kernel."""
    # Matches the float32 torch module; complex128 inputs are downcast.
    x = x.astype(jnp.complex64)
    orig_shape = x.shape
    n = x.size

    # TODO(synk): Mosaic cannot take complex64 refs and lax.bitcast_convert_type
    # rejects complex dtypes, so the real/imag split and the final lax.complex
    # recombine must stay outside the kernel.
    re = jnp.real(x).reshape(-1)
    im = jnp.imag(x).reshape(-1)

    rows = pl.cdiv(n, _LANES)
    block_rows = _choose_block_rows(rows)
    grid_steps = pl.cdiv(rows, block_rows)
    rows_padded = grid_steps * block_rows

    pad = rows_padded * _LANES - n
    if pad > 0:
        # Fold tail padding into a single small zero append per plane —
        # never a full-plane jnp.pad rewrite.
        zeros = jnp.zeros((pad,), jnp.float32)
        re = jnp.concatenate([re, zeros])
        im = jnp.concatenate([im, zeros])

    re2d = re.reshape(rows_padded, _LANES)
    im2d = im.reshape(rows_padded, _LANES)

    spec = pl.BlockSpec((block_rows, _LANES), lambda i: (i, 0))

    out_re2d, out_im2d = pl.pallas_call(
        _complex_relu_kernel,
        out_shape=(
            jax.ShapeDtypeStruct((rows_padded, _LANES), jnp.float32),
            jax.ShapeDtypeStruct((rows_padded, _LANES), jnp.float32),
        ),
        grid_spec=pltpu.PrefetchScalarGridSpec(
            num_scalar_prefetch=0,
            grid=(grid_steps,),
            in_specs=[spec, spec],
            out_specs=[spec, spec],
        ),
        compiler_params=pltpu.CompilerParams(
            dimension_semantics=("parallel",),
            # 4 streams x 2 buffers x 2 MiB = 16 MiB peak; raise the scoped
            # limit so v5e's 16 MiB default doesn't OOM. Safe on all chips.
            vmem_limit_bytes=32 * 1024 * 1024,
        ),
        # Planes are freshly built intermediates — safe to donate their HBM.
        input_output_aliases={0: 0, 1: 1},
    )(re2d, im2d)

    out_re = out_re2d.reshape(-1)[:n].reshape(orig_shape)
    out_im = out_im2d.reshape(-1)[:n].reshape(orig_shape)
    return lax.complex(out_re, out_im)  # complex64


if __name__ == "__main__":
    key = jax.random.PRNGKey(0)
    k_re, k_im = jax.random.split(key)
    shape = (2, 4, 16, 16)  # NCHW, same convention as the PyTorch module input
    x_re = jax.random.normal(k_re, shape, dtype=jnp.float32)
    x_im = jax.random.normal(k_im, shape, dtype=jnp.float32)
    x = (x_re + 1j * x_im).astype(jnp.complex64)

    out = complex_relu(x)
    out = jax.block_until_ready(out)

    # Reference: relu on real and imag parts independently.
    ref_re = jnp.maximum(x_re, 0.0)
    ref_im = jnp.maximum(x_im, 0.0)

    assert out.shape == shape and out.dtype == jnp.complex64
    assert jnp.allclose(jnp.real(out), ref_re, atol=1e-6)
    assert jnp.allclose(jnp.imag(out), ref_im, atol=1e-6)

    print("KERNEL_OK")
</pallas_src>

<mosaic_0001>
module attributes {stable_mosaic.version = 11 : i64} {
  func.func @_complex_relu_kernel(%arg0: i32, %arg1: memref<16x128xf32, #tpu.memory_space<vmem>>, %arg2: memref<16x128xf32, #tpu.memory_space<vmem>>, %arg3: memref<16x128xf32, #tpu.memory_space<vmem>>, %arg4: memref<16x128xf32, #tpu.memory_space<vmem>>) attributes {dimension_semantics = [#tpu.dimension_semantics<parallel>], iteration_bounds = array<i64: 1>, scalar_prefetch = 0 : i64, scratch_operands = 0 : i64, tpu.core_type = #tpu.core_type<tc>, window_params = [{transform_indices = @transform_0, window_bounds = array<i64: 16, 128>}, {transform_indices = @transform_1, window_bounds = array<i64: 16, 128>}, {transform_indices = @transform_2, window_bounds = array<i64: 16, 128>}, {transform_indices = @transform_3, window_bounds = array<i64: 16, 128>}]} {
    %c0 = arith.constant 0 : index
    %c0_0 = arith.constant 0 : index
    %0 = vector.load %arg1[%c0, %c0_0] : memref<16x128xf32, #tpu.memory_space<vmem>>, vector<16x128xf32>
    %cst = arith.constant 0.000000e+00 : f32
    %1 = vector.broadcast %cst : f32 to vector<16x128xf32>
    %2 = arith.maximumf %0, %1 : vector<16x128xf32>
    %c0_1 = arith.constant 0 : index
    %c0_2 = arith.constant 0 : index
    %3 = vector.load %arg3[%c0_1, %c0_2] : memref<16x128xf32, #tpu.memory_space<vmem>>, vector<16x128xf32>
    tpu.vector_store %arg3[%c0_1, %c0_2], %2 {strides = array<i32>} : memref<16x128xf32, #tpu.memory_space<vmem>>, vector<16x128xf32>,
    %c0_3 = arith.constant 0 : index
    %c0_4 = arith.constant 0 : index
    %4 = vector.load %arg2[%c0_3, %c0_4] : memref<16x128xf32, #tpu.memory_space<vmem>>, vector<16x128xf32>
    %cst_5 = arith.constant 0.000000e+00 : f32
    %5 = vector.broadcast %cst_5 : f32 to vector<16x128xf32>
    %6 = arith.maximumf %4, %5 : vector<16x128xf32>
    %c0_6 = arith.constant 0 : index
    %c0_7 = arith.constant 0 : index
    %7 = vector.load %arg4[%c0_6, %c0_7] : memref<16x128xf32, #tpu.memory_space<vmem>>, vector<16x128xf32>
    tpu.vector_store %arg4[%c0_6, %c0_7], %6 {strides = array<i32>} : memref<16x128xf32, #tpu.memory_space<vmem>>, vector<16x128xf32>,
    return
  }
  func.func @transform_0(%arg0: i32) -> (i32, i32) {
    %c0_i32 = arith.constant 0 : i32
    %c0_i32_0 = arith.constant 0 : i32
    return %arg0, %c0_i32 : i32, i32
  }
  func.func @transform_1(%arg0: i32) -> (i32, i32) {
    %c0_i32 = arith.constant 0 : i32
    %c0_i32_0 = arith.constant 0 : i32
    return %arg0, %c0_i32 : i32, i32
  }
  func.func @transform_2(%arg0: i32) -> (i32, i32) {
    %c0_i32 = arith.constant 0 : i32
    %c0_i32_0 = arith.constant 0 : i32
    return %arg0, %c0_i32 : i32, i32
  }
  func.func @transform_3(%arg0: i32) -> (i32, i32) {
    %c0_i32 = arith.constant 0 : i32
    %c0_i32_0 = arith.constant 0 : i32
    return %arg0, %c0_i32 : i32, i32
  }
}

</mosaic_0001>

<llo_original>
// kernel: tpu_custom_call.1
$region0: #{tpu_custom_call.1}
  #allocation0 [shape = 'u32[]', space=smem, size = 0x4, offset = 0x4, fixed_abs, tag = 'smem constant byte address 0x4 - core index']
  #allocation1 [shape = 'u32[144,128]{1,0:T(1,128)}', space=vmem, size = 0x12000, scoped, tag = 'internal scratch']
  %s0 = inlined_call_operand.hbm [shape: f32[16,128], index: 0, kind: input, shape index: {}, may-alias: {0,2}]
  %s1 = inlined_call_operand.hbm [shape: f32[16,128], index: 1, kind: input, shape index: {}, may-alias: {1,3}]
  %s2 = inlined_call_operand.hbm [shape: f32[16,128], index: 2, kind: output, shape index: {0}, may-alias: {0,2}]
  %s3 = inlined_call_operand.hbm [shape: f32[16,128], index: 3, kind: output, shape index: {1}, may-alias: {1,3}]
  %4 = xla_tuple %s2, %s3
  %s5 = sld [smem:[#allocation0]]
  $region34: #{tpu_custom_call.1} parent=0
    _
  %s7 = ssub.s32 1, %s5
  %s8 = scalar_select 0, %s7, %s5
  $region1: #{tpu_custom_call.1} parent=0
    #allocation2 [shape = 'u8[8192]{0}', space=vmem, size = 0x2000, scoped, tag = 'input window, operand 0, single buffered']
    #allocation3 [shape = 's32[1]{0}', space=sflag, size = 0x4, scoped, tag = 'scoped memory for tpu_custom_call.1']
    #allocation4 [shape = 's32[1]{0}', space=sflag, size = 0x4, scoped, tag = 'scoped memory for tpu_custom_call.1']
    #allocation5 [shape = 'u8[8192]{0}', space=vmem, size = 0x2000, scoped, tag = 'input window, operand 1, single buffered']
    #allocation6 [shape = 's32[1]{0}', space=sflag, size = 0x4, scoped, tag = 'scoped memory for tpu_custom_call.1']
    #allocation7 [shape = 'u8[8192]{0}', space=vmem, size = 0x2000, scoped, tag = 'output window, operand 0, single buffered']
    #allocation8 [shape = 'u8[8192]{0}', space=vmem, size = 0x2000, scoped, tag = 'output window, operand 1, single buffered']
    #allocation9 [shape = 's32[1]{0}', space=sflag, size = 0x4, scoped, tag = 'scoped memory for tpu_custom_call.1']
    %9 = vsyncpa [#allocation3], 0
    %10 = vsyncpa [#allocation6], 0
    %11 = vsyncpa [#allocation4], 0
    %12 = vsyncpa [#allocation9], 0
    // Predicated region
    $region2: #{tpu_custom_call.1} parent=1 // pred_check
      _
    $region3: #{tpu_custom_call.1} parent=1 // pred_check_branch
      %14 = sbr.rel (0) target = $region5
    $region4: #{tpu_custom_call.1} parent=1 // pred_region
      %s16 = ssub.s32 256, 256
      %17 = vsyncadd [#allocation3], %s16
      %s18 = sshll.u32 [#allocation2], 4
      %s19 = int_to_ptr.vmem [resolvable:$true] %s18
      %24 = dma.hbm_to_vmem [thread:$0]  %s0, 256, %s19, [#allocation3], 128, 128, 8
    $region5: #{tpu_custom_call.1} parent=1 // pred_fallthru
      _
    // Predicated region
    $region6: #{tpu_custom_call.1} parent=1 // pred_check
      _
    $region7: #{tpu_custom_call.1} parent=1 // pred_check_branch
      %26 = sbr.rel (0) target = $region9
    $region8: #{tpu_custom_call.1} parent=1 // pred_region
      %s28 = ssub.s32 256, 256
      %29 = vsyncadd [#allocation6], %s28
      %s30 = sshll.u32 [#allocation5], 4
      %s31 = int_to_ptr.vmem [resolvable:$true] %s30
      %36 = dma.hbm_to_vmem [thread:$0]  %s1, 256, %s31, [#allocation6], 128, 128, 8
    $region9: #{tpu_custom_call.1} parent=1 // pred_fallthru
      _
    // Predicated region
    $region10: #{tpu_custom_call.1} parent=1 // pred_check
      _
    $region11: #{tpu_custom_call.1} parent=1 // pred_check_branch
      %38 = sbr.rel (0) target = $region13
    $region12: #{tpu_custom_call.1} parent=1 // pred_region
      %39 = dma.done [#allocation3], 256
    $region13: #{tpu_custom_call.1} parent=1 // pred_fallthru
      _
    // Predicated region
    $region14: #{tpu_custom_call.1} parent=1 // pred_check
      _
    $region15: #{tpu_custom_call.1} parent=1 // pred_check_branch
      %41 = sbr.rel (0) target = $region17
    $region16: #{tpu_custom_call.1} parent=1 // pred_region
      %42 = dma.done [#allocation6], 256
    $region17: #{tpu_custom_call.1} parent=1 // pred_fallthru
      _
    %v43 = vld [vmem:[#allocation2] sm:$0xff]
    %v44 = vld [vmem:[#allocation2 + $0x8] sm:$0xff]
    %v45 = vmax.f32 %v43, 0.0
    %v46 = vmax.f32 %v44, 0.0
    %47 = vst [vmem:[#allocation7] sm:$0xff] %v45
    %48 = vst [vmem:[#allocation7 + $0x8] sm:$0xff] %v46
    %v49 = vld [vmem:[#allocation5] sm:$0xff]
    %v50 = vld [vmem:[#allocation5 + $0x8] sm:$0xff]
    %v51 = vmax.f32 %v49, 0.0
    %v52 = vmax.f32 %v50, 0.0
    %53 = vst [vmem:[#allocation8] sm:$0xff] %v51
    %54 = vst [vmem:[#allocation8 + $0x8] sm:$0xff] %v52
    // Predicated region
    $region18: #{tpu_custom_call.1} parent=1 // pred_check
      _
    $region19: #{tpu_custom_call.1} parent=1 // pred_check_branch
      %56 = sbr.rel (0) target = $region21
    $region20: #{tpu_custom_call.1} parent=1 // pred_region
      %s58 = ssub.s32 256, 256
      %59 = vsyncadd [#allocation4], %s58
      %s60 = sshll.u32 [#allocation7], 4
      %s61 = int_to_ptr.vmem [resolvable:$true] %s60
      %66 = dma.vmem_to_hbm [thread:$0]  %s61, 256, %s2, [#allocation4], 128, 128, 8
    $region21: #{tpu_custom_call.1} parent=1 // pred_fallthru
      _
    // Predicated region
    $region22: #{tpu_custom_call.1} parent=1 // pred_check
      _
    $region23: #{tpu_custom_call.1} parent=1 // pred_check_branch
      %68 = sbr.rel (0) target = $region25
    $region24: #{tpu_custom_call.1} parent=1 // pred_region
      %s70 = ssub.s32 256, 256
      %71 = vsyncadd [#allocation9], %s70
      %s72 = sshll.u32 [#allocation8], 4
      %s73 = int_to_ptr.vmem [resolvable:$true] %s72
      %78 = dma.vmem_to_hbm [thread:$0]  %s73, 256, %s3, [#allocation9], 128, 128, 8
    $region25: #{tpu_custom_call.1} parent=1 // pred_fallthru
      _
    // Predicated region
    $region26: #{tpu_custom_call.1} parent=1 // pred_check
      _
    $region27: #{tpu_custom_call.1} parent=1 // pred_check_branch
      %80 = sbr.rel (0) target = $region29
    $region28: #{tpu_custom_call.1} parent=1 // pred_region
      %81 = dma.done [#allocation4], 256
    $region29: #{tpu_custom_call.1} parent=1 // pred_fallthru
      _
    // Predicated region
    $region30: #{tpu_custom_call.1} parent=1 // pred_check
      _
    $region31: #{tpu_custom_call.1} parent=1 // pred_check_branch
      %83 = sbr.rel (0) target = $region33
    $region32: #{tpu_custom_call.1} parent=1 // pred_region
      %84 = dma.done [#allocation9], 256
    $region33: #{tpu_custom_call.1} parent=1 // pred_fallthru
      _
    %85 = vsyncpa [#allocation3], 1
    %86 = vsyncpa [#allocation6], 1
    %87 = vsyncpa [#allocation4], 1
    %88 = vsyncpa [#allocation9], 1

</llo_original>
